<compile_context>
chip_gen: v5e
topology: v5e:2x2
jax: 0.10.0
libtpu: 0.0.40
codegen_flags: <defaults>
</compile_context>

<pallas_src>
import jax
import jax.numpy as jnp
from jax.experimental import pallas as pl
from jax.experimental.pallas import tpu as pltpu


def _round_up(n: int, m: int) -> int:
    return (n + m - 1) // m * m


def dnn_kernel(x_ref, w1_ref, b1_ref, w2_ref, b2_ref, o_ref):
    # In-register cast of the streamed f32 x tile to the MXU dtype.
    x = x_ref[...].astype(w1_ref.dtype)
    # fc1 on the MXU (bf16 operands, f32 accumulation).
    h = jnp.dot(x, w1_ref[...], preferred_element_type=jnp.float32)
    # Bias add + ReLU in f32 on the VPU.
    h = jnp.maximum(h + b1_ref[...], 0.0)
    # fc2: cast activation to the MXU dtype right before the dot.
    y = jnp.dot(h.astype(w2_ref.dtype), w2_ref[...],
                preferred_element_type=jnp.float32)
    o_ref[...] = (y + b2_ref[...]).astype(o_ref.dtype)


def prepare_params(w1, b1, w2, b2, *, mxu_dtype=jnp.bfloat16):
    """Pre-bake the parameters once (cast + bias reshape); reuse every call."""
    w1_p = jnp.asarray(w1, mxu_dtype)                      # [in, hidden]
    w2_p = jnp.asarray(w2, mxu_dtype)                      # [hidden, out]
    b1_p = jnp.asarray(b1, jnp.float32).reshape(1, -1)     # [1, hidden]
    b2_p = jnp.asarray(b2, jnp.float32).reshape(1, -1)     # [1, out]
    return w1_p, b1_p, w2_p, b2_p


def _choose_batch_tile(batch: int, max_batch_tile: int) -> int:
    # Multiple of 8 (f32 sublane).  When batch allows, keep >=2 grid steps so
    # v7x can shard the "parallel" axis across both TensorCores.
    tm = min(max_batch_tile, _round_up(max(batch, 1), 8))
    if batch > 8:
        tm = min(tm, _round_up(-(-batch // 2), 8))
    return max(tm, 8)


def dnn_forward(x, params, *, max_batch_tile=512):
    """y = relu(x @ W1 + b1) @ W2 + b2 with pre-baked `params`."""
    w1_p, b1_p, w2_p, b2_p = params
    batch, in_size = x.shape
    in_w1, hidden_size = w1_p.shape
    assert in_w1 == in_size
    out_size = w2_p.shape[1]

    tm = _choose_batch_tile(batch, max_batch_tile)
    batch_p = _round_up(batch, tm)

    x_f32 = jnp.asarray(x, jnp.float32)
    if batch_p != batch:
        # Only the batch dim is ever padded (feature dims stay full-extent).
        x_f32 = jnp.pad(x_f32, ((0, batch_p - batch), (0, 0)))

    grid = (batch_p // tm,)

    mxu_bytes = jnp.dtype(w1_p.dtype).itemsize
    cost = pl.CostEstimate(
        flops=2 * batch_p * (in_size * hidden_size + hidden_size * out_size),
        transcendentals=0,
        bytes_accessed=(w1_p.size + w2_p.size) * mxu_bytes
        + (x_f32.size + b1_p.size + b2_p.size + batch_p * out_size) * 4,
    )

    out_padded = pl.pallas_call(
        dnn_kernel,
        out_shape=jax.ShapeDtypeStruct((batch_p, out_size), jnp.float32),
        grid=grid,
        in_specs=[
            # x tiles stream along the batch grid axis (full-extent lane dim,
            # no padded/bf16 HBM copy).
            pl.BlockSpec((tm, in_size), lambda i: (i, 0)),
            # Weights / biases: constant block index -> VMEM-resident.
            pl.BlockSpec((in_size, hidden_size), lambda i: (0, 0)),
            pl.BlockSpec((1, hidden_size), lambda i: (0, 0)),
            pl.BlockSpec((hidden_size, out_size), lambda i: (0, 0)),
            pl.BlockSpec((1, out_size), lambda i: (0, 0)),
        ],
        # Unpadded (tm, out_size) output block: 32x less write traffic than a
        # 128-lane padded f32 store.
        out_specs=pl.BlockSpec((tm, out_size), lambda i: (i, 0)),
        compiler_params=pltpu.CompilerParams(
            dimension_semantics=("parallel",),
        ),
        cost_estimate=cost,
    )(x_f32, w1_p, b1_p, w2_p, b2_p)

    if batch_p != batch:
        out_padded = out_padded[:batch]
    return out_padded


def init_params(key, input_size, hidden_size, output_size):
    k1, k2, k3, k4 = jax.random.split(key, 4)
    # kaiming_normal_(nonlinearity='relu'): std = sqrt(2 / fan_in)
    w1 = jax.random.normal(k1, (input_size, hidden_size), jnp.float32) * jnp.sqrt(
        2.0 / input_size
    )
    w2 = jax.random.normal(k2, (hidden_size, output_size), jnp.float32) * jnp.sqrt(
        2.0 / hidden_size
    )
    # PyTorch Linear default bias init: U(-1/sqrt(fan_in), 1/sqrt(fan_in)).
    b1 = jax.random.uniform(
        k3, (hidden_size,), jnp.float32,
        minval=-1.0 / jnp.sqrt(input_size), maxval=1.0 / jnp.sqrt(input_size)
    )
    b2 = jax.random.uniform(
        k4, (output_size,), jnp.float32,
        minval=-1.0 / jnp.sqrt(hidden_size), maxval=1.0 / jnp.sqrt(hidden_size)
    )
    return w1, b1, w2, b2


if __name__ == "__main__":
    input_size, hidden_size, output_size = 16, 32, 4
    batch = 8

    key = jax.random.PRNGKey(0)
    kx, kp = jax.random.split(key)
    x = jax.random.normal(kx, (batch, input_size), jnp.float32)
    w1, b1, w2, b2 = init_params(kp, input_size, hidden_size, output_size)

    # Pre-bake parameters once; the forward never re-pads / re-casts them.
    params = prepare_params(w1, b1, w2, b2)
    fwd = jax.jit(dnn_forward)

    out = jax.block_until_ready(fwd(x, params))
    assert out.shape == (batch, output_size)

    # Reference with the same bf16 MXU-operand casts (should match tightly).
    xb, w1b, w2b = (a.astype(jnp.bfloat16) for a in (x, w1, w2))
    h_ref = jnp.maximum(
        jnp.dot(xb, w1b, preferred_element_type=jnp.float32) + b1[None, :], 0.0
    )
    ref_bf16 = jnp.dot(h_ref.astype(jnp.bfloat16), w2b,
                       preferred_element_type=jnp.float32) + b2[None, :]
    assert jnp.allclose(out, ref_bf16, atol=1e-4, rtol=1e-4)

    # Sanity vs. full-f32 math (difference is only bf16 operand rounding,
    # an intentional precision trade-off vs. pure-f32 PyTorch Linear).
    ref_f32 = jnp.maximum(x @ w1 + b1[None, :], 0.0) @ w2 + b2[None, :]
    assert jnp.allclose(out, ref_f32, atol=5e-2, rtol=5e-2)

    print("KERNEL_OK")
</pallas_src>

<mosaic_0001>
module attributes {stable_mosaic.version = 11 : i64} {
  func.func @dnn_kernel(%arg0: i32, %arg1: memref<8x16xf32, #tpu.memory_space<vmem>>, %arg2: memref<16x32xbf16, #tpu.memory_space<vmem>>, %arg3: memref<1x32xf32, #tpu.memory_space<vmem>>, %arg4: memref<32x4xbf16, #tpu.memory_space<vmem>>, %arg5: memref<1x4xf32, #tpu.memory_space<vmem>>, %arg6: memref<8x4xf32, #tpu.memory_space<vmem>>) attributes {dimension_semantics = [#tpu.dimension_semantics<parallel>], iteration_bounds = array<i64: 1>, scalar_prefetch = 0 : i64, scratch_operands = 0 : i64, tpu.core_type = #tpu.core_type<tc>, window_params = [{transform_indices = @transform_0, window_bounds = array<i64: 8, 16>}, {pipeline_mode = #tpu.pipeline_mode<synchronous>, transform_indices = @transform_1, window_bounds = array<i64: 16, 32>}, {pipeline_mode = #tpu.pipeline_mode<synchronous>, transform_indices = @transform_2, window_bounds = array<i64: 1, 32>}, {pipeline_mode = #tpu.pipeline_mode<synchronous>, transform_indices = @transform_3, window_bounds = array<i64: 32, 4>}, {pipeline_mode = #tpu.pipeline_mode<synchronous>, transform_indices = @transform_4, window_bounds = array<i64: 1, 4>}, {transform_indices = @transform_5, window_bounds = array<i64: 8, 4>}]} {
    %c0 = arith.constant 0 : index
    %c0_0 = arith.constant 0 : index
    %0 = vector.load %arg1[%c0, %c0_0] : memref<8x16xf32, #tpu.memory_space<vmem>>, vector<8x16xf32>
    %1 = arith.truncf %0 : vector<8x16xf32> to vector<8x16xbf16>
    %c0_1 = arith.constant 0 : index
    %c0_2 = arith.constant 0 : index
    %2 = vector.load %arg2[%c0_1, %c0_2] : memref<16x32xbf16, #tpu.memory_space<vmem>>, vector<16x32xbf16>
    %cst = arith.constant dense<0.000000e+00> : vector<8x32xf32>
    %3 = tpu.matmul %1, %2, %cst {dimension_numbers = #tpu.dot_dimension_numbers<[1], [0], [0], [1], [0, 0, 1, 1], [], []>} : vector<8x16xbf16>, vector<16x32xbf16>, vector<8x32xf32> -> vector<8x32xf32>
    %c0_3 = arith.constant 0 : index
    %c0_4 = arith.constant 0 : index
    %4 = vector.load %arg3[%c0_3, %c0_4] : memref<1x32xf32, #tpu.memory_space<vmem>>, vector<1x32xf32>
    %5 = vector.broadcast %4 : vector<1x32xf32> to vector<8x32xf32>
    %6 = arith.addf %3, %5 : vector<8x32xf32>
    %cst_5 = arith.constant 0.000000e+00 : f32
    %7 = vector.broadcast %cst_5 : f32 to vector<8x32xf32>
    %8 = arith.maximumf %6, %7 : vector<8x32xf32>
    %9 = arith.truncf %8 : vector<8x32xf32> to vector<8x32xbf16>
    %c0_6 = arith.constant 0 : index
    %c0_7 = arith.constant 0 : index
    %10 = vector.load %arg4[%c0_6, %c0_7] : memref<32x4xbf16, #tpu.memory_space<vmem>>, vector<32x4xbf16>
    %cst_8 = arith.constant dense<0.000000e+00> : vector<8x4xf32>
    %11 = tpu.matmul %9, %10, %cst_8 {dimension_numbers = #tpu.dot_dimension_numbers<[1], [0], [0], [1], [0, 0, 1, 1], [], []>} : vector<8x32xbf16>, vector<32x4xbf16>, vector<8x4xf32> -> vector<8x4xf32>
    %c0_9 = arith.constant 0 : index
    %c0_10 = arith.constant 0 : index
    %12 = vector.load %arg5[%c0_9, %c0_10] : memref<1x4xf32, #tpu.memory_space<vmem>>, vector<1x4xf32>
    %13 = vector.broadcast %12 : vector<1x4xf32> to vector<8x4xf32>
    %14 = arith.addf %11, %13 : vector<8x4xf32>
    %c0_11 = arith.constant 0 : index
    %c0_12 = arith.constant 0 : index
    %15 = vector.load %arg6[%c0_11, %c0_12] : memref<8x4xf32, #tpu.memory_space<vmem>>, vector<8x4xf32>
    tpu.vector_store %arg6[%c0_11, %c0_12], %14 {strides = array<i32>} : memref<8x4xf32, #tpu.memory_space<vmem>>, vector<8x4xf32>,
    return
  }
  func.func @transform_0(%arg0: i32) -> (i32, i32) {
    %c0_i32 = arith.constant 0 : i32
    %c0_i32_0 = arith.constant 0 : i32
    return %arg0, %c0_i32 : i32, i32
  }
  func.func @transform_1(%arg0: i32) -> (i32, i32) {
    %c0_i32 = arith.constant 0 : i32
    %c0_i32_0 = arith.constant 0 : i32
    %c0_i32_1 = arith.constant 0 : i32
    return %c0_i32, %c0_i32_0 : i32, i32
  }
  func.func @transform_2(%arg0: i32) -> (i32, i32) {
    %c0_i32 = arith.constant 0 : i32
    %c0_i32_0 = arith.constant 0 : i32
    %c0_i32_1 = arith.constant 0 : i32
    return %c0_i32, %c0_i32_0 : i32, i32
  }
  func.func @transform_3(%arg0: i32) -> (i32, i32) {
    %c0_i32 = arith.constant 0 : i32
    %c0_i32_0 = arith.constant 0 : i32
    %c0_i32_1 = arith.constant 0 : i32
    return %c0_i32, %c0_i32_0 : i32, i32
  }
  func.func @transform_4(%arg0: i32) -> (i32, i32) {
    %c0_i32 = arith.constant 0 : i32
    %c0_i32_0 = arith.constant 0 : i32
    %c0_i32_1 = arith.constant 0 : i32
    return %c0_i32, %c0_i32_0 : i32, i32
  }
  func.func @transform_5(%arg0: i32) -> (i32, i32) {
    %c0_i32 = arith.constant 0 : i32
    %c0_i32_0 = arith.constant 0 : i32
    return %arg0, %c0_i32 : i32, i32
  }
}

</mosaic_0001>

<llo_original>
// kernel: dnn_forward.1
$region0: #{dnn_forward.1}
  #allocation0 [shape = 'u32[]', space=smem, size = 0x4, offset = 0x4, fixed_abs, tag = 'smem constant byte address 0x4 - core index']
  #allocation1 [shape = 'u32[72,128]{1,0:T(1,128)}', space=vmem, size = 0x9000, scoped, tag = 'internal scratch']
  %s0 = inlined_call_operand.vmem [shape: f32[8,16], index: 0, kind: input, shape index: {}]
  %s1 = inlined_call_operand.vmem [shape: bf16[16,32], index: 1, kind: input, shape index: {}]
  %s2 = inlined_call_operand.vmem [shape: f32[1,32], index: 2, kind: input, shape index: {}]
  %s3 = inlined_call_operand.vmem [shape: bf16[32,4], index: 3, kind: input, shape index: {}]
  %s4 = inlined_call_operand.vmem [shape: f32[1,4], index: 4, kind: input, shape index: {}]
  %s5 = inlined_call_operand.vmem [shape: f32[8,4], index: 5, kind: output, shape index: {}]
  %s6 = sld [smem:[#allocation0]]
  $region30: #{dnn_forward.1} parent=0
    _
  %s8 = ssub.s32 1, %s6
  %s9 = scalar_select 0, %s8, %s6
  // Predicated region
  $region2: #{dnn_forward.1} parent=0 // pred_check
    _
  $region3: #{dnn_forward.1} parent=0 // pred_check_branch
    %11 = sbr.rel (0) target = $region5
  $region4: #{dnn_forward.1} parent=0 // pred_region
    _
  $region5: #{dnn_forward.1} parent=0 // pred_fallthru
    _
  // Predicated region
  $region6: #{dnn_forward.1} parent=0 // pred_check
    _
  $region7: #{dnn_forward.1} parent=0 // pred_check_branch
    %13 = sbr.rel (0) target = $region9
  $region8: #{dnn_forward.1} parent=0 // pred_region
    _
  $region9: #{dnn_forward.1} parent=0 // pred_fallthru
    _
  // Predicated region
  $region10: #{dnn_forward.1} parent=0 // pred_check
    _
  $region11: #{dnn_forward.1} parent=0 // pred_check_branch
    %15 = sbr.rel (0) target = $region13
  $region12: #{dnn_forward.1} parent=0 // pred_region
    _
  $region13: #{dnn_forward.1} parent=0 // pred_fallthru
    _
  // Predicated region
  $region14: #{dnn_forward.1} parent=0 // pred_check
    _
  $region15: #{dnn_forward.1} parent=0 // pred_check_branch
    %17 = sbr.rel (0) target = $region17
  $region16: #{dnn_forward.1} parent=0 // pred_region
    _
  $region17: #{dnn_forward.1} parent=0 // pred_fallthru
    _
  // Predicated region
  $region18: #{dnn_forward.1} parent=0 // pred_check
    _
  $region19: #{dnn_forward.1} parent=0 // pred_check_branch
    %19 = sbr.rel (0) target = $region21
  $region20: #{dnn_forward.1} parent=0 // pred_region
    _
  $region21: #{dnn_forward.1} parent=0 // pred_fallthru
    _
  %v21 = vld [vmem:[%s0] sm:$0xff]
  %v22 = vpack.c.bf16 %v21, %v21
  %v23 = vld [vmem:[%s1] sm:$0xf]
  %v24 = vld [vmem:[%s1 + $0x4] sm:$0xf]
  %v25 = vld [vmem:[%s2] sm:$0x1]
  %v27 = vperm.slane %v25, 0
  %v31 = vunpack.c.l.b16 %v23
  %v32 = vunpack.c.l.b16 %v24
  %v33 = vpack.c.b16 %v32, %v31
  %vm35 = vcmask 130048
  %v37 = vsel %vm35, %v22, 0
  %39 = vmatpush.bf16.msra.mxu0 0
  %40 = vmatpush.bf16.msra.mxu0 0
  %41 = vmatpush.bf16.msra.mxu0 0
  %42 = vmatpush.bf16.msra.mxu0 0
  %43 = vmatpush.bf16.msra.mxu0 0
  %44 = vmatpush.bf16.msra.mxu0 0
  %45 = vmatpush.bf16.msra.mxu0 0
  %46 = vmatpush.bf16.msra.mxu0 %v33
  %47 = vmatmul.bf16.gmra.mxu0 %v37
  %v48 = vpop.f32.mrf.mxu0
  %v49 = vadd.f32 %v27, %v48
  %v50 = vpop.f32.mrf.mxu0
  %51 = vdwg.mxu0
  %v52 = vmax.f32 %v49, 0.0
  %v53 = vpack.c.bf16 %v52, %v52
  %v54 = vld [vmem:[%s3] sm:$0xf]
  %v55 = vld [vmem:[%s3 + $0x4] sm:$0xf]
  %v56 = vld [vmem:[%s3 + $0x8] sm:$0xf]
  %v57 = vld [vmem:[%s3 + $0xc] sm:$0xf]
  %v58 = vld [vmem:[%s4] sm:$0x1]
  %v60 = vperm.slane %v58, 0
  %v66 = vunpack.c.l.b16 %v54
  %v67 = vunpack.c.l.b16 %v55
  %v68 = vunpack.c.l.b16 %v56
  %v69 = vunpack.c.l.b16 %v57
  %v70 = vpack.c.b16 %v67, %v66
  %v71 = vpack.c.b16 %v69, %v68
  %vm74 = vcmask 261120
  %v76 = vsel %vm74, %v53, 0
  %78 = vmatpush.bf16.msra.mxu0 0
  %79 = vmatpush.bf16.msra.mxu0 0
  %80 = vmatpush.bf16.msra.mxu0 0
  %81 = vmatpush.bf16.msra.mxu0 0
  %82 = vmatpush.bf16.msra.mxu0 0
  %83 = vmatpush.bf16.msra.mxu0 0
  %84 = vmatpush.bf16.msra.mxu0 %v71
  %85 = vmatpush.bf16.msra.mxu0 %v70
  %86 = vmatmul.bf16.gmra.mxu0 %v76
  %v87 = vpop.f32.mrf.mxu0
  %v88 = vadd.f32 %v60, %v87
  %v89 = vpop.f32.mrf.mxu0
  %90 = vdwg.mxu0
  %vm91 = vcmask 31744
  %92 = vst.msk [vmem:[%s5] sm:$0xff] %vm91, %v88
  // Predicated region
  $region22: #{dnn_forward.1} parent=0 // pred_check
    _
  $region23: #{dnn_forward.1} parent=0 // pred_check_branch
    %94 = sbr.rel (0) target = $region25
  $region24: #{dnn_forward.1} parent=0 // pred_region
    _
  $region25: #{dnn_forward.1} parent=0 // pred_fallthru
    _
  // Predicated region
  $region26: #{dnn_forward.1} parent=0 // pred_check
    _
  $region27: #{dnn_forward.1} parent=0 // pred_check_branch
    %96 = sbr.rel (0) target = $region29
  $region28: #{dnn_forward.1} parent=0 // pred_region
    _
  $region29: #{dnn_forward.1} parent=0 // pred_fallthru
    _

</llo_original>
